<compile_context>
chip_gen: v7x
topology: tpu7x:2x2x1
jax: 0.10.0
libtpu: 0.0.40
codegen_flags: <defaults>
</compile_context>

<pallas_src>
import jax
import jax.numpy as jnp
from jax.experimental import pallas as pl
from jax.experimental.pallas import tpu as pltpu

# Small, forward-consistent sizes.
B = 2             # batch per branch
C = 4             # input channels
H = W = 16        # spatial
REP_DIM = 32      # resnet.rep_dim
FEATURE_DIM = 16  # feature_dim
CLASS_NUM = 10    # class_num

HW = H * W
M = 2 * B                  # both views batched together
PROJ_OUT = 32              # padded width of the fused second projector layer (16+10 -> 32)
OUT_PAD = 128              # lane-dense output width (z | c | zero pad)

# Parameter-slab row layout (slab shape: [SLAB_ROWS, 128]).
ROW_W1 = 0                 # rows [0,32):   [wi1 | wc1]            cols 0:64
ROW_W2 = REP_DIM           # rows [32,96):  blockdiag(wi2, wc2)    cols 0:32
ROW_WB = 3 * REP_DIM       # rows [96,100): backbone head weight   cols 0:32
ROW_BB = ROW_WB + C        # row 100: backbone bias                cols 0:32
ROW_B1 = ROW_BB + 1        # row 101: [bi1 | bc1]                  cols 0:64
ROW_B2 = ROW_BB + 2        # row 102: [bi2 | bc2]                  cols 0:26
SLAB_ROWS = 104            # padded to a multiple of 8 sublanes


def network_kernel(x_ref, p_ref, out_ref):
    # x_ref:   [2B, C, H*W]     both views, channels on sublanes, spatial on lanes
    # p_ref:   [SLAB_ROWS, 128] packed weights + biases (single resident slab)
    # out_ref: [2B, 128]        cols 0:16 = z (normalized), cols 16:26 = c (softmax)

    # ---- backbone stand-in: global-average pool (lane reduce) + tiny K=C matmul ----
    pooled = jnp.sum(x_ref[...], axis=-1) * (1.0 / HW)                    # [2B, C]
    h = jnp.dot(pooled, p_ref[ROW_WB:ROW_WB + C, 0:REP_DIM],
                preferred_element_type=jnp.float32)
    h = h + p_ref[ROW_BB:ROW_BB + 1, 0:REP_DIM]                           # [2B, 32]

    # ---- fused first projector layer: [wi1 | wc1] -> ReLU ----
    y1 = jnp.dot(h, p_ref[ROW_W1:ROW_W1 + REP_DIM, 0:2 * REP_DIM],
                 preferred_element_type=jnp.float32)
    y1 = jnp.maximum(y1 + p_ref[ROW_B1:ROW_B1 + 1, 0:2 * REP_DIM], 0.0)   # [2B, 64]

    # ---- fused second projector layer: block-diag(wi2, wc2) ----
    y2 = jnp.dot(y1, p_ref[ROW_W2:ROW_W2 + 2 * REP_DIM, 0:PROJ_OUT],
                 preferred_element_type=jnp.float32)
    y2 = y2 + p_ref[ROW_B2:ROW_B2 + 1, 0:PROJ_OUT]                        # [2B, 32]

    zi = y2[:, 0:FEATURE_DIM]                                             # [2B, 16]
    logits = y2[:, FEATURE_DIM:FEATURE_DIM + CLASS_NUM]                   # [2B, 10]

    # ---- L2 normalize (torch F.normalize: x / max(||x||, 1e-12)) ----
    sumsq = jnp.sum(zi * zi, axis=1, keepdims=True)
    z = zi * jax.lax.rsqrt(jnp.maximum(sumsq, 1e-24))

    # ---- softmax(dim=1), max-subtracted, exact EUP reciprocal ----
    mx = jnp.max(logits, axis=1, keepdims=True)
    e = jnp.exp(logits - mx)
    cprob = e * pl.reciprocal(jnp.sum(e, axis=1, keepdims=True), approx=False)

    # ---- single lane-dense full-width store ----
    pad = jnp.zeros((M, OUT_PAD - FEATURE_DIM - CLASS_NUM), jnp.float32)
    out_ref[...] = jnp.concatenate([z, cprob, pad], axis=1)


def init_params(key):
    """Deterministic synthetic parameters (weights stored as [in, out])."""
    ks = jax.random.split(key, 10)
    s = 0.1
    wb  = s * jax.random.normal(ks[0], (C, REP_DIM), jnp.float32)
    bb  = s * jax.random.normal(ks[1], (1, REP_DIM), jnp.float32)
    wi1 = s * jax.random.normal(ks[2], (REP_DIM, REP_DIM), jnp.float32)
    bi1 = s * jax.random.normal(ks[3], (1, REP_DIM), jnp.float32)
    wi2 = s * jax.random.normal(ks[4], (REP_DIM, FEATURE_DIM), jnp.float32)
    bi2 = s * jax.random.normal(ks[5], (1, FEATURE_DIM), jnp.float32)
    wc1 = s * jax.random.normal(ks[6], (REP_DIM, REP_DIM), jnp.float32)
    bc1 = s * jax.random.normal(ks[7], (1, REP_DIM), jnp.float32)
    wc2 = s * jax.random.normal(ks[8], (REP_DIM, CLASS_NUM), jnp.float32)
    bc2 = s * jax.random.normal(ks[9], (1, CLASS_NUM), jnp.float32)
    return (wb, bb, wi1, bi1, wi2, bi2, wc1, bc1, wc2, bc2)


def pack_params(params):
    """Pack the 10 arrays into one VMEM-friendly [104, 128] slab.

    Called ONCE at init (outside the jitted forward) — the forward only ships
    the finished slab.
    """
    wb, bb, wi1, bi1, wi2, bi2, wc1, bc1, wc2, bc2 = params

    w_first = jnp.concatenate([wi1, wc1], axis=1)                  # [32, 64]
    w_second = jnp.zeros((2 * REP_DIM, PROJ_OUT), jnp.float32)     # [64, 32]
    w_second = w_second.at[0:REP_DIM, 0:FEATURE_DIM].set(wi2)
    w_second = w_second.at[REP_DIM:, FEATURE_DIM:FEATURE_DIM + CLASS_NUM].set(wc2)

    slab = jnp.zeros((SLAB_ROWS, 128), jnp.float32)
    slab = slab.at[ROW_W1:ROW_W1 + REP_DIM, 0:2 * REP_DIM].set(w_first)
    slab = slab.at[ROW_W2:ROW_W2 + 2 * REP_DIM, 0:PROJ_OUT].set(w_second)
    slab = slab.at[ROW_WB:ROW_WB + C, 0:REP_DIM].set(wb)
    slab = slab.at[ROW_BB, 0:REP_DIM].set(bb.reshape(-1))
    slab = slab.at[ROW_B1, 0:2 * REP_DIM].set(
        jnp.concatenate([bi1.reshape(-1), bc1.reshape(-1)]))
    slab = slab.at[ROW_B2, 0:FEATURE_DIM + CLASS_NUM].set(
        jnp.concatenate([bi2.reshape(-1), bc2.reshape(-1)]))
    return slab


@jax.jit
def network_forward(x_i, x_j, slab):
    xs = jnp.concatenate([x_i, x_j], axis=0).astype(jnp.float32)   # [2B, C, H, W]
    xf = xs.reshape(M, C, HW)                                      # [2B, C, H*W]

    out = pl.pallas_call(
        network_kernel,
        out_shape=jax.ShapeDtypeStruct((M, OUT_PAD), jnp.float32),
        in_specs=[
            pl.BlockSpec(memory_space=pltpu.MemorySpace.VMEM),     # x (both views)
            pl.BlockSpec(memory_space=pltpu.MemorySpace.VMEM),     # parameter slab
        ],
        out_specs=pl.BlockSpec(memory_space=pltpu.MemorySpace.VMEM),
    )(xf, slab)

    z = out[:, 0:FEATURE_DIM]
    c = out[:, FEATURE_DIM:FEATURE_DIM + CLASS_NUM]
    return z[0:B], z[B:M], c[0:B], c[B:M]


def reference_forward(x_i, x_j, params):
    """Pure-JAX reference of the same forward math (same backbone stand-in)."""
    wb, bb, wi1, bi1, wi2, bi2, wc1, bc1, wc2, bc2 = params

    def branch(x):
        pooled = jnp.mean(x.reshape(x.shape[0], C, HW), axis=-1)
        h = pooled @ wb + bb
        hi = jnp.maximum(h @ wi1 + bi1, 0.0)
        zi = hi @ wi2 + bi2
        z = zi / jnp.maximum(jnp.linalg.norm(zi, axis=1, keepdims=True), 1e-12)
        hc = jnp.maximum(h @ wc1 + bc1, 0.0)
        logits = hc @ wc2 + bc2
        c = jax.nn.softmax(logits, axis=1)
        return z, c

    zi_, ci_ = branch(x_i)
    zj_, cj_ = branch(x_j)
    return zi_, zj_, ci_, cj_


if __name__ == "__main__":
    key = jax.random.PRNGKey(0)
    k_xi, k_xj, k_p = jax.random.split(key, 3)
    x_i = jax.random.normal(k_xi, (B, C, H, W), jnp.float32)   # NCHW
    x_j = jax.random.normal(k_xj, (B, C, H, W), jnp.float32)   # NCHW
    params = init_params(k_p)

    # Pack parameters once at init (hoisted out of the per-call jit).
    slab = jax.block_until_ready(pack_params(params))

    z_i, z_j, c_i, c_j = network_forward(x_i, x_j, slab)
    jax.block_until_ready((z_i, z_j, c_i, c_j))

    # shape / invariant checks
    assert z_i.shape == (B, FEATURE_DIM) and z_j.shape == (B, FEATURE_DIM)
    assert c_i.shape == (B, CLASS_NUM) and c_j.shape == (B, CLASS_NUM)
    assert bool(jnp.allclose(jnp.linalg.norm(z_i, axis=1), 1.0, atol=1e-4))
    assert bool(jnp.allclose(jnp.linalg.norm(z_j, axis=1), 1.0, atol=1e-4))
    assert bool(jnp.allclose(jnp.sum(c_i, axis=1), 1.0, atol=1e-4))
    assert bool(jnp.allclose(jnp.sum(c_j, axis=1), 1.0, atol=1e-4))

    # numerical check against the pure-JAX reference
    refs = reference_forward(x_i, x_j, params)
    for got, ref in zip((z_i, z_j, c_i, c_j), refs):
        assert bool(jnp.allclose(got, ref, atol=1e-4, rtol=1e-4)), float(
            jnp.max(jnp.abs(got - ref)))

    print("KERNEL_OK")
</pallas_src>

<mosaic_0001>
module attributes {stable_mosaic.version = 11 : i64} {
  func.func @network_kernel(%arg0: memref<4x4x256xf32, #tpu.memory_space<vmem>>, %arg1: memref<104x128xf32, #tpu.memory_space<vmem>>, %arg2: memref<4x128xf32, #tpu.memory_space<vmem>>) attributes {dimension_semantics = [], scalar_prefetch = 0 : i64, scratch_operands = 0 : i64, tpu.core_type = #tpu.core_type<tc>} {
    %c0 = arith.constant 0 : index
    %c0_0 = arith.constant 0 : index
    %c0_1 = arith.constant 0 : index
    %0 = vector.load %arg0[%c0, %c0_0, %c0_1] : memref<4x4x256xf32, #tpu.memory_space<vmem>>, vector<4x4x256xf32>
    %cst = arith.constant dense<0.000000e+00> : vector<4x4xf32>
    %1 = vector.multi_reduction <add>, %0, %cst [2] : vector<4x4x256xf32> to vector<4x4xf32>
    %cst_2 = arith.constant 3.906250e-03 : f32
    %2 = vector.broadcast %cst_2 : f32 to vector<4x4xf32>
    %3 = arith.mulf %1, %2 : vector<4x4xf32>
    %c96 = arith.constant 96 : index
    %c0_3 = arith.constant 0 : index
    %4 = vector.load %arg1[%c96, %c0_3] : memref<104x128xf32, #tpu.memory_space<vmem>>, vector<4x32xf32>
    %cst_4 = arith.constant dense<0.000000e+00> : vector<4x32xf32>
    %5 = tpu.matmul %3, %4, %cst_4 {dimension_numbers = #tpu.dot_dimension_numbers<[1], [0], [0], [1], [0, 0, 1, 1], [], []>} : vector<4x4xf32>, vector<4x32xf32>, vector<4x32xf32> -> vector<4x32xf32>
    %c100 = arith.constant 100 : index
    %c0_5 = arith.constant 0 : index
    %6 = vector.load %arg1[%c100, %c0_5] : memref<104x128xf32, #tpu.memory_space<vmem>>, vector<1x32xf32>
    %7 = vector.broadcast %6 : vector<1x32xf32> to vector<4x32xf32>
    %8 = arith.addf %5, %7 : vector<4x32xf32>
    %c0_6 = arith.constant 0 : index
    %c0_7 = arith.constant 0 : index
    %9 = vector.load %arg1[%c0_6, %c0_7] : memref<104x128xf32, #tpu.memory_space<vmem>>, vector<32x64xf32>
    %cst_8 = arith.constant dense<0.000000e+00> : vector<4x64xf32>
    %10 = tpu.matmul %8, %9, %cst_8 {dimension_numbers = #tpu.dot_dimension_numbers<[1], [0], [0], [1], [0, 0, 1, 1], [], []>} : vector<4x32xf32>, vector<32x64xf32>, vector<4x64xf32> -> vector<4x64xf32>
    %c101 = arith.constant 101 : index
    %c0_9 = arith.constant 0 : index
    %11 = vector.load %arg1[%c101, %c0_9] : memref<104x128xf32, #tpu.memory_space<vmem>>, vector<1x64xf32>
    %12 = vector.broadcast %11 : vector<1x64xf32> to vector<4x64xf32>
    %13 = arith.addf %10, %12 : vector<4x64xf32>
    %cst_10 = arith.constant 0.000000e+00 : f32
    %14 = vector.broadcast %cst_10 : f32 to vector<4x64xf32>
    %15 = arith.maximumf %13, %14 : vector<4x64xf32>
    %c32 = arith.constant 32 : index
    %c0_11 = arith.constant 0 : index
    %16 = vector.load %arg1[%c32, %c0_11] : memref<104x128xf32, #tpu.memory_space<vmem>>, vector<64x32xf32>
    %cst_12 = arith.constant dense<0.000000e+00> : vector<4x32xf32>
    %17 = tpu.matmul %15, %16, %cst_12 {dimension_numbers = #tpu.dot_dimension_numbers<[1], [0], [0], [1], [0, 0, 1, 1], [], []>} : vector<4x64xf32>, vector<64x32xf32>, vector<4x32xf32> -> vector<4x32xf32>
    %c102 = arith.constant 102 : index
    %c0_13 = arith.constant 0 : index
    %18 = vector.load %arg1[%c102, %c0_13] : memref<104x128xf32, #tpu.memory_space<vmem>>, vector<1x32xf32>
    %19 = vector.broadcast %18 : vector<1x32xf32> to vector<4x32xf32>
    %20 = arith.addf %17, %19 : vector<4x32xf32>
    %21 = vector.extract_strided_slice %20 {offsets = [0, 0], sizes = [4, 16], strides = [1, 1]} : vector<4x32xf32> to vector<4x16xf32>
    %22 = vector.extract_strided_slice %20 {offsets = [0, 16], sizes = [4, 10], strides = [1, 1]} : vector<4x32xf32> to vector<4x10xf32>
    %23 = arith.mulf %21, %21 : vector<4x16xf32>
    %cst_14 = arith.constant dense<0.000000e+00> : vector<4xf32>
    %24 = vector.multi_reduction <add>, %23, %cst_14 [1] : vector<4x16xf32> to vector<4xf32>
    %25 = vector.shape_cast %24 : vector<4xf32> to vector<4x1xf32>
    %cst_15 = arith.constant 1.000000e-24 : f32
    %26 = vector.broadcast %cst_15 : f32 to vector<4x1xf32>
    %27 = arith.maximumf %25, %26 : vector<4x1xf32>
    %28 = math.rsqrt %27 : vector<4x1xf32>
    %29 = vector.broadcast %28 : vector<4x1xf32> to vector<4x16xf32>
    %30 = arith.mulf %21, %29 : vector<4x16xf32>
    %cst_16 = arith.constant dense<0xFF800000> : vector<4xf32>
    %31 = vector.multi_reduction <maximumf>, %22, %cst_16 [1] : vector<4x10xf32> to vector<4xf32>
    %32 = vector.shape_cast %31 : vector<4xf32> to vector<4x1xf32>
    %33 = vector.broadcast %32 : vector<4x1xf32> to vector<4x10xf32>
    %34 = arith.subf %22, %33 : vector<4x10xf32>
    %35 = math.exp %34 : vector<4x10xf32>
    %cst_17 = arith.constant dense<0.000000e+00> : vector<4xf32>
    %36 = vector.multi_reduction <add>, %35, %cst_17 [1] : vector<4x10xf32> to vector<4xf32>
    %37 = vector.shape_cast %36 : vector<4xf32> to vector<4x1xf32>
    %38 = tpu.reciprocal %37 : vector<4x1xf32> -> vector<4x1xf32>
    %39 = vector.broadcast %38 : vector<4x1xf32> to vector<4x10xf32>
    %40 = arith.mulf %35, %39 : vector<4x10xf32>
    %cst_18 = arith.constant 0.000000e+00 : f32
    %41 = vector.broadcast %cst_18 : f32 to vector<4x102xf32>
    %42 = tpu.concatenate %30, %40, %41 in 1 : vector<4x16xf32>, vector<4x10xf32>, vector<4x102xf32> -> vector<4x128xf32>
    %c0_19 = arith.constant 0 : index
    %c0_20 = arith.constant 0 : index
    %43 = vector.load %arg2[%c0_19, %c0_20] : memref<4x128xf32, #tpu.memory_space<vmem>>, vector<4x128xf32>
    tpu.vector_store %arg2[%c0_19, %c0_20], %42 {strides = array<i32>} : memref<4x128xf32, #tpu.memory_space<vmem>>, vector<4x128xf32>,
    return
  }
}

</mosaic_0001>

<llo_original>
// kernel: network_forward.1
$region0: #{network_forward.1}
  #allocation0 [shape = 'u32[]', space=smem, size = 0x4, offset = 0x4, fixed_abs, tag = 'smem constant byte address 0x4 - core index']
  #allocation1 [shape = 'u32[144,128]{1,0:T(1,128)}', space=vmem, size = 0x12000, scoped, tag = 'internal scratch']
  %s0 = inlined_call_operand.vmem [shape: f32[4,4,256], index: 0, kind: input, shape index: {}]
  %s1 = inlined_call_operand.vmem [shape: f32[104,128], index: 1, kind: input, shape index: {}]
  %s2 = inlined_call_operand.vmem [shape: f32[4,128], index: 2, kind: output, shape index: {}]
  %s3 = sld [smem:[#allocation0]]
  $region18: #{network_forward.1} parent=0
    _
  %s5 = ssub.s32 1, %s3
  %s6 = scalar_select 0, %s5, %s3
  // Predicated region
  $region2: #{network_forward.1} parent=0 // pred_check
    _
  $region3: #{network_forward.1} parent=0 // pred_check_branch
    %8 = sbr.rel (0) target = $region5
  $region4: #{network_forward.1} parent=0 // pred_region
    _
  $region5: #{network_forward.1} parent=0 // pred_fallthru
    _
  // Predicated region
  $region6: #{network_forward.1} parent=0 // pred_check
    _
  $region7: #{network_forward.1} parent=0 // pred_check_branch
    %10 = sbr.rel (0) target = $region9
  $region8: #{network_forward.1} parent=0 // pred_region
    _
  $region9: #{network_forward.1} parent=0 // pred_fallthru
    _
  %v11 = vld [vmem:[%s0] sm:$0xff]
  %v12 = vld [vmem:[%s0 + $0x8] sm:$0xff]
  %v13 = vld [vmem:[%s0 + $0x10] sm:$0xff]
  %v14 = vld [vmem:[%s0 + $0x18] sm:$0xff]
  %v19 = vcombine.high %v11, %v11
  %v20 = vcombine.high %v12, %v12
  %v21 = vcombine.high %v13, %v13
  %v22 = vcombine.high %v14, %v14
  %vm27 = vcmask 1043456
  %v28 = vsel %vm27, %v11, 0.0
  %v29 = vsel %vm27, %v19, 0.0
  %v30 = vadd.f32 %v28, %v29
  %31 = vadd.xlane.f32.xlu0 %v30
  %v32 = vpop.xlane.xlu0 %31
  %v33 = vsel %vm27, %v12, 0.0
  %v34 = vsel %vm27, %v20, 0.0
  %v35 = vadd.f32 %v33, %v34
  %36 = vadd.xlane.f32.xlu0 %v35
  %v37 = vpop.xlane.xlu0 %36
  %v38 = vsel %vm27, %v13, 0.0
  %v39 = vsel %vm27, %v21, 0.0
  %v40 = vadd.f32 %v38, %v39
  %41 = vadd.xlane.f32.xlu0 %v40
  %v42 = vpop.xlane.xlu0 %41
  %v43 = vsel %vm27, %v14, 0.0
  %v44 = vsel %vm27, %v22, 0.0
  %v45 = vadd.f32 %v43, %v44
  %46 = vadd.xlane.f32.xlu0 %v45
  %v47 = vpop.xlane.xlu0 %46
  %v48 = vmul.f32 %v32, 0.00390625
  %v49 = vmul.f32 %v37, 0.00390625
  %v50 = vmul.f32 %v42, 0.00390625
  %v51 = vmul.f32 %v47, 0.00390625
  %v52 = vld [vmem:[%s1 + $0x60] sm:$0xf]
  %v53 = vld [vmem:[%s1 + $0x64] sm:$0x1]
  %v54 = vlaneseq
  %v55 = vshrl.u32 %v54, 7
  %v56 = vsub.s32 0, %v55
  %v57 = vrot.slane %v53, %v56
  %v62 = vlaneseq
  %v63 = vand.u32 %v62, 127
  %v64 = vlaneseq
  %v65 = vshrl.u32 %v64, 7
  %v66 = vsub.s32 %v63, %v65
  %v67 = vrot.slane %v48, %v66
  %v68 = vlaneseq
  %v69 = vshrl.u32 %v68, 7
  %v70 = vsub.s32 %v63, %v69
  %v71 = vrot.slane %v49, %v70
  %v72 = vlaneseq
  %v73 = vshrl.u32 %v72, 7
  %v74 = vsub.s32 %v63, %v73
  %v75 = vrot.slane %v50, %v74
  %v76 = vlaneseq
  %v77 = vshrl.u32 %v76, 7
  %v78 = vsub.s32 %v63, %v77
  %v79 = vrot.slane %v51, %v78
  %vm80 = vcmask 1041409
  %v81 = vsel %vm80, %v71, %v67
  %vm82 = vcmask 1042434
  %v83 = vsel %vm82, %v75, %v81
  %vm84 = vcmask 1043459
  %v85 = vsel %vm84, %v79, %v83
  %vm86 = vcmask 31744
  %v87 = vsel %vm86, %v85, 0
  %v90 = vsel %vm27, %v52, 0
  %92 = vmatprep.subr.mxu0 0.0
  %93 = vmatpush1.msra.mxu0 %v90
  %94 = vmatprep.subr.mxu0 0.0
  %95 = vmatpush1.msra.mxu0 0.0
  %96 = vmatprep.subr.mxu0 0.0
  %97 = vmatpush1.msra.mxu0 0.0
  %98 = vmatprep.subr.mxu0 0.0
  %99 = vmatpush1.msra.mxu0 0.0
  %100 = vmatprep.subr.mxu0 0.0
  %101 = vmatpush1.msra.mxu0 0.0
  %102 = vmatprep.subr.mxu0 0.0
  %103 = vmatpush1.msra.mxu0 0.0
  %104 = vmatprep.subr.mxu0 0.0
  %105 = vmatpush1.msra.mxu0 0.0
  %106 = vmatprep.subr.mxu0 0.0
  %107 = vmatpush1.msra.mxu0 0.0
  %108 = vmatprep.subr.mxu0 0.0
  %109 = vmatpush1.msra.mxu0 0.0
  %110 = vmatprep.subr.mxu0 0.0
  %111 = vmatpush1.msra.mxu0 0.0
  %112 = vmatprep.subr.mxu0 0.0
  %113 = vmatpush1.msra.mxu0 0.0
  %114 = vmatprep.subr.mxu0 0.0
  %115 = vmatpush1.msra.mxu0 0.0
  %116 = vmatprep.subr.mxu0 0.0
  %117 = vmatpush1.msra.mxu0 0.0
  %118 = vmatprep.subr.mxu0 0.0
  %119 = vmatpush1.msra.mxu0 0.0
  %120 = vmatprep.subr.mxu0 0.0
  %121 = vmatpush1.msra.mxu0 0.0
  %122 = vmatprep.subr.mxu0 0.0
  %123 = vmatpush1.msra.mxu0 0.0
  %124 = vmatprep.subr.mxu0 0.0
  %125 = vmatpush1.msra.mxu0 0.0
  %126 = vmatprep.subr.mxu0 0.0
  %127 = vmatpush1.msra.mxu0 0.0
  %128 = vmatprep.subr.mxu0 0.0
  %129 = vmatpush1.msra.mxu0 0.0
  %130 = vmatprep.subr.mxu0 0.0
  %131 = vmatpush1.msra.mxu0 0.0
  %132 = vmatprep.subr.mxu0 0.0
  %133 = vmatpush1.msra.mxu0 0.0
  %134 = vmatprep.subr.mxu0 0.0
  %135 = vmatpush1.msra.mxu0 0.0
  %136 = vmatprep.subr.mxu0 0.0
  %137 = vmatpush1.msra.mxu0 0.0
  %138 = vmatprep.subr.mxu0 0.0
  %139 = vmatpush1.msra.mxu0 0.0
  %140 = vmatprep.subr.mxu0 0.0
  %141 = vmatpush1.msra.mxu0 0.0
  %142 = vmatprep.subr.mxu0 0.0
  %143 = vmatpush1.msra.mxu0 0.0
  %144 = vmatprep.subr.mxu0 0.0
  %145 = vmatpush1.msra.mxu0 0.0
  %146 = vmatprep.subr.mxu0 0.0
  %147 = vmatpush1.msra.mxu0 0.0
  %148 = vmatprep.subr.mxu0 0.0
  %149 = vmatpush1.msra.mxu0 0.0
  %150 = vmatprep.subr.mxu0 0.0
  %151 = vmatpush1.msra.mxu0 0.0
  %152 = vmatprep.subr.mxu0 0.0
  %153 = vmatpush1.msra.mxu0 0.0
  %154 = vmatprep.subr.mxu0 0.0
  %155 = vmatpush1.msra.mxu0 0.0
  %156 = vmatprep.mubr.f32.mxu0 0.0
  %157 = vmatmul.mubr.f32.gmra.mrb[0].mxu0 %v87
  %v158 = vpop.f32.mrb[0].mxu0
  %v159 = vadd.f32 %v57, %v158
  %v160 = vpop.f32.mrb[0].mxu0
  %161 = vdwg.mxu0
  %v162 = vld [vmem:[%s1] sm:$0xff]
  %v163 = vld [vmem:[%s1 + $0x8] sm:$0xff]
  %v164 = vld [vmem:[%s1 + $0x10] sm:$0xff]
  %v165 = vld [vmem:[%s1 + $0x18] sm:$0xff]
  %v166 = vld [vmem:[%s1 + $0x65] sm:$0x1]
  %v167 = vlaneseq
  %v168 = vshrl.u32 %v167, 7
  %v169 = vsub.s32 0, %v168
  %v170 = vrot.slane %v166, %v169
  %vm171 = vcmask 261120
  %v173 = vsel %vm171, %v159, 0
  %175 = vmatprep.subr.mxu0 0.0
  %176 = vmatpush1.msra.mxu0 %v162
  %177 = vmatprep.subr.mxu0 0.0
  %178 = vmatpush1.msra.mxu0 %v163
  %179 = vmatprep.subr.mxu0 0.0
  %180 = vmatpush1.msra.mxu0 %v164
  %181 = vmatprep.subr.mxu0 0.0
  %182 = vmatpush1.msra.mxu0 %v165
  %183 = vmatprep.subr.mxu0 0.0
  %184 = vmatpush1.msra.mxu0 0.0
  %185 = vmatprep.subr.mxu0 0.0
  %186 = vmatpush1.msra.mxu0 0.0
  %187 = vmatprep.subr.mxu0 0.0
  %188 = vmatpush1.msra.mxu0 0.0
  %189 = vmatprep.subr.mxu0 0.0
  %190 = vmatpush1.msra.mxu0 0.0
  %191 = vmatprep.subr.mxu0 0.0
  %192 = vmatpush1.msra.mxu0 0.0
  %193 = vmatprep.subr.mxu0 0.0
  %194 = vmatpush1.msra.mxu0 0.0
  %195 = vmatprep.subr.mxu0 0.0
  %196 = vmatpush1.msra.mxu0 0.0
  %197 = vmatprep.subr.mxu0 0.0
  %198 = vmatpush1.msra.mxu0 0.0
  %199 = vmatprep.subr.mxu0 0.0
  %200 = vmatpush1.msra.mxu0 0.0
  %201 = vmatprep.subr.mxu0 0.0
  %202 = vmatpush1.msra.mxu0 0.0
  %203 = vmatprep.subr.mxu0 0.0
  %204 = vmatpush1.msra.mxu0 0.0
  %205 = vmatprep.subr.mxu0 0.0
  %206 = vmatpush1.msra.mxu0 0.0
  %207 = vmatprep.subr.mxu0 0.0
  %208 = vmatpush1.msra.mxu0 0.0
  %209 = vmatprep.subr.mxu0 0.0
  %210 = vmatpush1.msra.mxu0 0.0
  %211 = vmatprep.subr.mxu0 0.0
  %212 = vmatpush1.msra.mxu0 0.0
  %213 = vmatprep.subr.mxu0 0.0
  %214 = vmatpush1.msra.mxu0 0.0
  %215 = vmatprep.subr.mxu0 0.0
  %216 = vmatpush1.msra.mxu0 0.0
  %217 = vmatprep.subr.mxu0 0.0
  %218 = vmatpush1.msra.mxu0 0.0
  %219 = vmatprep.subr.mxu0 0.0
  %220 = vmatpush1.msra.mxu0 0.0
  %221 = vmatprep.subr.mxu0 0.0
  %222 = vmatpush1.msra.mxu0 0.0
  %223 = vmatprep.subr.mxu0 0.0
  %224 = vmatpush1.msra.mxu0 0.0
  %225 = vmatprep.subr.mxu0 0.0
  %226 = vmatpush1.msra.mxu0 0.0
  %227 = vmatprep.subr.mxu0 0.0
  %228 = vmatpush1.msra.mxu0 0.0
  %229 = vmatprep.subr.mxu0 0.0
  %230 = vmatpush1.msra.mxu0 0.0
  %231 = vmatprep.subr.mxu0 0.0
  %232 = vmatpush1.msra.mxu0 0.0
  %233 = vmatprep.subr.mxu0 0.0
  %234 = vmatpush1.msra.mxu0 0.0
  %235 = vmatprep.subr.mxu0 0.0
  %236 = vmatpush1.msra.mxu0 0.0
  %237 = vmatprep.subr.mxu0 0.0
  %238 = vmatpush1.msra.mxu0 0.0
  %239 = vmatprep.mubr.f32.mxu0 0.0
  %240 = vmatmul.mubr.f32.gmra.mrb[0].mxu0 %v173
  %v241 = vpop.f32.mrb[0].mxu0
  %v242 = vadd.f32 %v170, %v241
  %v243 = vpop.f32.mrb[0].mxu0
  %244 = vdwg.mxu0
  %v245 = vmax.f32 %v242, 0.0
  %v246 = vld [vmem:[%s1 + $0x20] sm:$0xff]
  %v247 = vld [vmem:[%s1 + $0x28] sm:$0xff]
  %v248 = vld [vmem:[%s1 + $0x30] sm:$0xff]
  %v249 = vld [vmem:[%s1 + $0x38] sm:$0xff]
  %v250 = vld [vmem:[%s1 + $0x40] sm:$0xff]
  %v251 = vld [vmem:[%s1 + $0x48] sm:$0xff]
  %v252 = vld [vmem:[%s1 + $0x50] sm:$0xff]
  %v253 = vld [vmem:[%s1 + $0x58] sm:$0xff]
  %v254 = vld [vmem:[%s1 + $0x66] sm:$0x1]
  %v255 = vlaneseq
  %v256 = vshrl.u32 %v255, 7
  %v257 = vsub.s32 0, %v256
  %v258 = vrot.slane %v254, %v257
  %vm259 = vcmask 523264
  %v261 = vsel %vm259, %v245, 0
  %263 = vmatprep.subr.mxu0 0.0
  %264 = vmatpush1.msra.mxu0 %v246
  %265 = vmatprep.subr.mxu0 0.0
  %266 = vmatpush1.msra.mxu0 %v247
  %267 = vmatprep.subr.mxu0 0.0
  %268 = vmatpush1.msra.mxu0 %v248
  %269 = vmatprep.subr.mxu0 0.0
  %270 = vmatpush1.msra.mxu0 %v249
  %271 = vmatprep.subr.mxu0 0.0
  %272 = vmatpush1.msra.mxu0 %v250
  %273 = vmatprep.subr.mxu0 0.0
  %274 = vmatpush1.msra.mxu0 %v251
  %275 = vmatprep.subr.mxu0 0.0
  %276 = vmatpush1.msra.mxu0 %v252
  %277 = vmatprep.subr.mxu0 0.0
  %278 = vmatpush1.msra.mxu0 %v253
  %279 = vmatprep.subr.mxu0 0.0
  %280 = vmatpush1.msra.mxu0 0.0
  %281 = vmatprep.subr.mxu0 0.0
  %282 = vmatpush1.msra.mxu0 0.0
  %283 = vmatprep.subr.mxu0 0.0
  %284 = vmatpush1.msra.mxu0 0.0
  %285 = vmatprep.subr.mxu0 0.0
  %286 = vmatpush1.msra.mxu0 0.0
  %287 = vmatprep.subr.mxu0 0.0
  %288 = vmatpush1.msra.mxu0 0.0
  %289 = vmatprep.subr.mxu0 0.0
  %290 = vmatpush1.msra.mxu0 0.0
  %291 = vmatprep.subr.mxu0 0.0
  %292 = vmatpush1.msra.mxu0 0.0
  %293 = vmatprep.subr.mxu0 0.0
  %294 = vmatpush1.msra.mxu0 0.0
  %295 = vmatprep.subr.mxu0 0.0
  %296 = vmatpush1.msra.mxu0 0.0
  %297 = vmatprep.subr.mxu0 0.0
  %298 = vmatpush1.msra.mxu0 0.0
  %299 = vmatprep.subr.mxu0 0.0
  %300 = vmatpush1.msra.mxu0 0.0
  %301 = vmatprep.subr.mxu0 0.0
  %302 = vmatpush1.msra.mxu0 0.0
  %303 = vmatprep.subr.mxu0 0.0
  %304 = vmatpush1.msra.mxu0 0.0
  %305 = vmatprep.subr.mxu0 0.0
  %306 = vmatpush1.msra.mxu0 0.0
  %307 = vmatprep.subr.mxu0 0.0
  %308 = vmatpush1.msra.mxu0 0.0
  %309 = vmatprep.subr.mxu0 0.0
  %310 = vmatpush1.msra.mxu0 0.0
  %311 = vmatprep.subr.mxu0 0.0
  %312 = vmatpush1.msra.mxu0 0.0
  %313 = vmatprep.subr.mxu0 0.0
  %314 = vmatpush1.msra.mxu0 0.0
  %315 = vmatprep.subr.mxu0 0.0
  %316 = vmatpush1.msra.mxu0 0.0
  %317 = vmatprep.subr.mxu0 0.0
  %318 = vmatpush1.msra.mxu0 0.0
  %319 = vmatprep.subr.mxu0 0.0
  %320 = vmatpush1.msra.mxu0 0.0
  %321 = vmatprep.subr.mxu0 0.0
  %322 = vmatpush1.msra.mxu0 0.0
  %323 = vmatprep.subr.mxu0 0.0
  %324 = vmatpush1.msra.mxu0 0.0
  %325 = vmatprep.subr.mxu0 0.0
  %326 = vmatpush1.msra.mxu0 0.0
  %327 = vmatprep.mubr.f32.mxu0 0.0
  %328 = vmatmul.mubr.f32.gmra.mrb[0].mxu0 %v261
  %v329 = vpop.f32.mrb[0].mxu0
  %v330 = vadd.f32 %v258, %v329
  %v331 = vpop.f32.mrb[0].mxu0
  %332 = vdwg.mxu0
  %v333 = vmul.f32 %v330, %v330
  %vm334 = vcmask 125952
  %v335 = vsel %vm334, %v333, 0.0
  %336 = vadd.xlane.f32.xlu0 %v335
  %v337 = vpop.xlane.xlu0 %336
  %v338 = vmax.f32 %v337, 1e-24
  %v339 = vrsqrt.pop %v338
  %v340 = vmul.f32 %v330, %v339
  %vm341 = vcmask 208000
  %v342 = vsel %vm341, %v330, -inf
  %343 = vmax.xlane.f32.xlu0 %v342
  %v344 = vpop.xlane.xlu0 %343
  %v345 = vsub.f32 %v330, %v344
  %v346 = vmul.f32 %v345, 1.442695
  %v347 = vpow.pop %v346
  %349 = vrot.lane.b32.xlu0 %v347, 112
  %v350 = vpop.permute.xlu0 %349
  %vm352 = vcmask 76800
  %v353 = vsel %vm352, %v350, 0.0
  %354 = vadd.xlane.f32.xlu0 %v353
  %v355 = vpop.xlane.xlu0 %354
  %v356 = vrcp.pop %v355
  %v357 = vmul.f32 %v347, %v356
  %vm358 = vcmask 130048
  %v359 = vsel %vm358, %v340, %v357
  %vm360 = vcmask 211968
  %v361 = vsel %vm360, %v359, 0.0
  %362 = vst [vmem:[%s2] sm:$0xf] %v361
  // Predicated region
  $region10: #{network_forward.1} parent=0 // pred_check
    _
  $region11: #{network_forward.1} parent=0 // pred_check_branch
    %364 = sbr.rel (0) target = $region13
  $region12: #{network_forward.1} parent=0 // pred_region
    _
  $region13: #{network_forward.1} parent=0 // pred_fallthru
    _
  // Predicated region
  $region14: #{network_forward.1} parent=0 // pred_check
    _
  $region15: #{network_forward.1} parent=0 // pred_check_branch
    %366 = sbr.rel (0) target = $region17
  $region16: #{network_forward.1} parent=0 // pred_region
    _
  $region17: #{network_forward.1} parent=0 // pred_fallthru
    _

</llo_original>
